<compile_context>
chip_gen: v5e
topology: v5e:2x2
jax: 0.10.0
libtpu: 0.0.40
codegen_flags: <defaults>
</compile_context>

<pallas_src>
import jax
import jax.numpy as jnp
from jax.experimental import pallas as pl
from jax.experimental.pallas import tpu as pltpu

_LANE = 128


def _make_controller_kernel(action_dim: int, latent_dim: int,
                            latent_pad: int, hidden_dim: int):
    """Build a kernel specialized on static (A, L, Lp, H)."""

    def kernel(latent_ref, hidden_ref, w_ref, b_ref, out_ref):
        lat = latent_ref[...]          # (B, L)  lane-dense
        hid = hidden_ref[...]          # (B, H)  lane-dense

        # action_dim is small & static -> unrolls into a few VPU mul + XLU
        # reduce bundles per column.  Each column is stored directly into its
        # lane of out_ref (no concatenate / lane relayout).
        for a in range(action_dim):
            wl_row = w_ref[a:a + 1, 0:latent_dim]                        # (1, L), lane offset 0
            wh_row = w_ref[a:a + 1, latent_pad:latent_pad + hidden_dim]  # (1, H), 128-lane aligned
            col = jnp.sum(lat * wl_row, axis=-1, keepdims=True)          # (B, 1)
            col = col + jnp.sum(hid * wh_row, axis=-1, keepdims=True)
            col = col + b_ref[a]                                          # scalar bias from SMEM
            out_ref[:, a:a + 1] = col.astype(out_ref.dtype)

    return kernel


def prepare_controller_params(weight, bias, latent_dimension):
    """One-time parameter prep (hoisted out of the per-call hot path).

    weight: (A, L+H) float32 in torch nn.Linear layout, bias: (A,) float32.
    Returns one merged lane-aligned weight w: (A, Lp+H), where
    Lp = ceil(L/128)*128 (latent columns zero-padded so the hidden columns
    start on a 128-lane boundary), and bias (A,).
    """
    weight = jnp.asarray(weight, jnp.float32)
    l_dim = latent_dimension
    l_pad = ((l_dim + _LANE - 1) // _LANE) * _LANE
    wl = weight[:, :l_dim]                             # (A, L)
    wh = weight[:, l_dim:]                             # (A, H)
    if l_pad != l_dim:
        wl = jnp.pad(wl, ((0, 0), (0, l_pad - l_dim)))
    w = jnp.concatenate([wl, wh], axis=1)              # (A, Lp + H)
    b = jnp.asarray(bias, jnp.float32)                 # (A,)
    return w, b


def controller_forward(latent, hidden, w, bias):
    """Single step.  latent: (B, L), hidden: (B, H), w: (A, Lp+H), bias: (A,).
    Returns (B, A) f32 == fc(cat([latent, hidden], dim=1))."""
    B, L = latent.shape
    _, H = hidden.shape
    A, Wp = w.shape
    Lp = Wp - H

    kernel = _make_controller_kernel(A, L, Lp, H)
    # Full-array blocks, single grid point: index_map takes no args, and the
    # block == array dims so the (8,128) divisibility rule does not apply.
    full = lambda shape: pl.BlockSpec(shape, lambda: (0,) * len(shape))
    cost = pl.CostEstimate(
        flops=2 * B * (L + H) * A,
        transcendentals=0,
        bytes_accessed=4 * (B * (L + H + A) + A * (Wp + 1)),
    )
    return pl.pallas_call(
        kernel,
        out_shape=jax.ShapeDtypeStruct((B, A), jnp.float32),
        in_specs=[
            full((B, L)),                                        # latent -> VMEM
            full((B, H)),                                        # hidden -> VMEM
            full((A, Wp)),                                       # merged weight -> VMEM
            pl.BlockSpec(memory_space=pltpu.MemorySpace.SMEM),   # bias -> SMEM
        ],
        out_specs=full((B, A)),
        cost_estimate=cost,
    )(latent, hidden, w, bias)


def controller_forward_rollout(latents, hiddens, w, bias):
    """Rollout over T timesteps as a grid axis.

    latents: (T, B, L), hiddens: (T, B, H), w: (A, Lp+H), bias: (A,).
    Returns (T, B, A).  The weight's index_map is constant so it stays
    VMEM-resident across all T steps (one weight DMA total), and per-call
    dispatch overhead is amortized over the rollout.
    """
    T, B, L = latents.shape
    _, _, H = hiddens.shape
    A, Wp = w.shape
    Lp = Wp - H

    kernel = _make_controller_kernel(A, L, Lp, H)
    cost = pl.CostEstimate(
        flops=2 * T * B * (L + H) * A,
        transcendentals=0,
        bytes_accessed=4 * (T * B * (L + H + A) + A * (Wp + 1)),
    )
    return pl.pallas_call(
        kernel,
        out_shape=jax.ShapeDtypeStruct((T, B, A), jnp.float32),
        grid=(T,),
        in_specs=[
            pl.BlockSpec((None, B, L), lambda t: (t, 0, 0)),     # per-step latent
            pl.BlockSpec((None, B, H), lambda t: (t, 0, 0)),     # per-step hidden
            pl.BlockSpec((A, Wp), lambda t: (0, 0)),             # weight: constant block -> resident
            pl.BlockSpec(memory_space=pltpu.MemorySpace.SMEM),   # bias -> SMEM
        ],
        out_specs=pl.BlockSpec((None, B, A), lambda t: (t, 0, 0)),
        compiler_params=pltpu.CompilerParams(
            dimension_semantics=("arbitrary",)),
        cost_estimate=cost,
    )(latents, hiddens, w, bias)


def _init_linear_params(key, in_features, out_features):
    # Deterministic init mimicking torch.nn.Linear (uniform in +/- 1/sqrt(fan_in)).
    k_w, k_b = jax.random.split(key)
    bound = 1.0 / jnp.sqrt(jnp.float32(in_features))
    weight = jax.random.uniform(
        k_w, (out_features, in_features), jnp.float32, -bound, bound
    )
    bias = jax.random.uniform(k_b, (out_features,), jnp.float32, -bound, bound)
    return weight, bias


if __name__ == "__main__":
    latent_dimension = 32
    hidden_units = 256
    batch = 2

    key = jax.random.PRNGKey(0)
    k_lat, k_hid, k_par, k_lat_r, k_hid_r, k_par3 = jax.random.split(key, 6)

    latent = jax.random.normal(k_lat, (batch, latent_dimension), jnp.float32)
    hidden = jax.random.normal(k_hid, (batch, hidden_units), jnp.float32)

    # --- action_dim = 1 (module default), single step ---
    weight1, bias1 = _init_linear_params(
        k_par, latent_dimension + hidden_units, 1
    )
    w1, b1 = prepare_controller_params(weight1, bias1, latent_dimension)  # once, not per call
    out1 = jax.block_until_ready(controller_forward(latent, hidden, w1, b1))
    ref1 = jnp.concatenate([latent, hidden], axis=1) @ weight1.T + bias1
    assert out1.shape == (batch, 1)
    assert jnp.allclose(out1, ref1, atol=1e-5, rtol=1e-5)

    # --- action_dim = 3: exercise the multi-column store path ---
    weight3, bias3 = _init_linear_params(
        k_par3, latent_dimension + hidden_units, 3
    )
    w3, b3 = prepare_controller_params(weight3, bias3, latent_dimension)
    out3 = jax.block_until_ready(controller_forward(latent, hidden, w3, b3))
    ref3 = jnp.concatenate([latent, hidden], axis=1) @ weight3.T + bias3
    assert out3.shape == (batch, 3)
    assert jnp.allclose(out3, ref3, atol=1e-5, rtol=1e-5)

    # --- rollout: T timesteps as a grid axis, weight VMEM-resident ---
    T = 8
    latents = jax.random.normal(
        k_lat_r, (T, batch, latent_dimension), jnp.float32
    )
    hiddens = jax.random.normal(k_hid_r, (T, batch, hidden_units), jnp.float32)
    out_r = jax.block_until_ready(
        controller_forward_rollout(latents, hiddens, w1, b1)
    )
    ref_r = jnp.einsum(
        "tbk,ak->tba", jnp.concatenate([latents, hiddens], axis=-1), weight1
    ) + bias1
    assert out_r.shape == (T, batch, 1)
    assert jnp.allclose(out_r, ref_r, atol=1e-5, rtol=1e-5)

    print("KERNEL_OK")
</pallas_src>

<mosaic_0001>
module attributes {stable_mosaic.version = 11 : i64} {
  func.func @kernel(%arg0: memref<2x32xf32, #tpu.memory_space<vmem>>, %arg1: memref<2x256xf32, #tpu.memory_space<vmem>>, %arg2: memref<1x384xf32, #tpu.memory_space<vmem>>, %arg3: memref<1xf32, #tpu.memory_space<smem>>, %arg4: memref<2x1xf32, #tpu.memory_space<vmem>>) attributes {dimension_semantics = [], scalar_prefetch = 0 : i64, scratch_operands = 0 : i64, tpu.core_type = #tpu.core_type<tc>} {
    %c0 = arith.constant 0 : index
    %c0_0 = arith.constant 0 : index
    %0 = vector.load %arg0[%c0, %c0_0] : memref<2x32xf32, #tpu.memory_space<vmem>>, vector<2x32xf32>
    %c0_1 = arith.constant 0 : index
    %c0_2 = arith.constant 0 : index
    %1 = vector.load %arg1[%c0_1, %c0_2] : memref<2x256xf32, #tpu.memory_space<vmem>>, vector<2x256xf32>
    %c0_3 = arith.constant 0 : index
    %c0_4 = arith.constant 0 : index
    %2 = vector.load %arg2[%c0_3, %c0_4] : memref<1x384xf32, #tpu.memory_space<vmem>>, vector<1x32xf32>
    %c0_5 = arith.constant 0 : index
    %c128 = arith.constant 128 : index
    %3 = vector.load %arg2[%c0_5, %c128] : memref<1x384xf32, #tpu.memory_space<vmem>>, vector<1x256xf32>
    %4 = vector.broadcast %2 : vector<1x32xf32> to vector<2x32xf32>
    %5 = arith.mulf %0, %4 : vector<2x32xf32>
    %cst = arith.constant dense<0.000000e+00> : vector<2xf32>
    %6 = vector.multi_reduction <add>, %5, %cst [1] : vector<2x32xf32> to vector<2xf32>
    %7 = vector.shape_cast %6 : vector<2xf32> to vector<2x1xf32>
    %8 = vector.broadcast %3 : vector<1x256xf32> to vector<2x256xf32>
    %9 = arith.mulf %1, %8 : vector<2x256xf32>
    %cst_6 = arith.constant dense<0.000000e+00> : vector<2xf32>
    %10 = vector.multi_reduction <add>, %9, %cst_6 [1] : vector<2x256xf32> to vector<2xf32>
    %11 = vector.shape_cast %10 : vector<2xf32> to vector<2x1xf32>
    %12 = arith.addf %7, %11 : vector<2x1xf32>
    %c0_7 = arith.constant 0 : index
    %13 = memref.load %arg3[%c0_7] : memref<1xf32, #tpu.memory_space<smem>>
    %14 = vector.broadcast %13 : f32 to vector<2x1xf32>
    %15 = arith.addf %12, %14 : vector<2x1xf32>
    %c0_8 = arith.constant 0 : index
    %c0_9 = arith.constant 0 : index
    %16 = vector.load %arg4[%c0_8, %c0_9] : memref<2x1xf32, #tpu.memory_space<vmem>>, vector<2x1xf32>
    tpu.vector_store %arg4[%c0_8, %c0_9], %15 {strides = array<i32>} : memref<2x1xf32, #tpu.memory_space<vmem>>, vector<2x1xf32>,
    return
  }
}

</mosaic_0001>

<llo_original>
// kernel: tpu_custom_call.1
$region0: #{tpu_custom_call.1}
  #allocation0 [shape = 'u32[]', space=smem, size = 0x4, offset = 0x4, fixed_abs, tag = 'smem constant byte address 0x4 - core index']
  #allocation1 [shape = 'u32[72,128]{1,0:T(1,128)}', space=vmem, size = 0x9000, scoped, tag = 'internal scratch']
  #allocation2 [shape = 'f32[1]{0:T(128)S(6)}', space=smem, size = 0x200, scoped, tag = 'scoped memory for tpu_custom_call.1']
  %s0 = inlined_call_operand.hbm [shape: f32[2,32], index: 0, kind: input, shape index: {}]
  %s1 = inlined_call_operand.hbm [shape: f32[2,256], index: 1, kind: input, shape index: {}]
  %s2 = inlined_call_operand.vmem [shape: f32[1,384], index: 2, kind: input, shape index: {}]
  %s3 = inlined_call_operand.<no memory space> [shape: f32[1], index: 3, kind: input, shape index: {}]
  %s4 = inlined_call_operand.vmem [shape: f32[2,1], index: 4, kind: output, shape index: {}]
  %s5 = sld [smem:[#allocation0]]
  $region34: #{tpu_custom_call.1} parent=0
    _
  %s7 = ssub.s32 1, %s5
  %s8 = scalar_select 0, %s7, %s5
  %9 = sst [smem:[#allocation2]] %s3
  $region1: #{tpu_custom_call.1} parent=0
    #allocation3 [shape = 'u8[1024]{0}', space=vmem, size = 0x400, scoped, tag = 'input window, operand 0, single buffered']
    #allocation4 [shape = 's32[1]{0}', space=sflag, size = 0x4, scoped, tag = 'scoped memory for tpu_custom_call.1']
    #allocation5 [shape = 'u8[2048]{0}', space=vmem, size = 0x800, scoped, tag = 'input window, operand 1, single buffered']
    #allocation6 [shape = 's32[1]{0}', space=sflag, size = 0x4, scoped, tag = 'scoped memory for tpu_custom_call.1']
    %10 = vsyncpa [#allocation4], 0
    %11 = vsyncpa [#allocation6], 0
    // Predicated region
    $region2: #{tpu_custom_call.1} parent=1 // pred_check
      _
    $region3: #{tpu_custom_call.1} parent=1 // pred_check_branch
      %13 = sbr.rel (0) target = $region5
    $region4: #{tpu_custom_call.1} parent=1 // pred_region
      %15 = vsyncadd [#allocation4], 0
      %s17 = sshll.u32 %s0, 4
      %s18 = int_to_ptr.hbm [resolvable:$true] %s17
      %s19 = sshll.u32 [#allocation3], 4
      %s20 = int_to_ptr.vmem [resolvable:$true] %s19
      %22 = dma.hbm_to_vmem [thread:$0]  %s18, 32, %s20, [#allocation4]
    $region5: #{tpu_custom_call.1} parent=1 // pred_fallthru
      _
    // Predicated region
    $region6: #{tpu_custom_call.1} parent=1 // pred_check
      _
    $region7: #{tpu_custom_call.1} parent=1 // pred_check_branch
      %24 = sbr.rel (0) target = $region9
    $region8: #{tpu_custom_call.1} parent=1 // pred_region
      %26 = vsyncadd [#allocation6], 0
      %s28 = sshll.u32 %s1, 4
      %s29 = int_to_ptr.hbm [resolvable:$true] %s28
      %s30 = sshll.u32 [#allocation5], 4
      %s31 = int_to_ptr.vmem [resolvable:$true] %s30
      %33 = dma.hbm_to_vmem [thread:$0]  %s29, 64, %s31, [#allocation6]
    $region9: #{tpu_custom_call.1} parent=1 // pred_fallthru
      _
    // Predicated region
    $region10: #{tpu_custom_call.1} parent=1 // pred_check
      _
    $region11: #{tpu_custom_call.1} parent=1 // pred_check_branch
      %35 = sbr.rel (0) target = $region13
    $region12: #{tpu_custom_call.1} parent=1 // pred_region
      _
    $region13: #{tpu_custom_call.1} parent=1 // pred_fallthru
      _
    // Predicated region
    $region14: #{tpu_custom_call.1} parent=1 // pred_check
      _
    $region15: #{tpu_custom_call.1} parent=1 // pred_check_branch
      %37 = sbr.rel (0) target = $region17
    $region16: #{tpu_custom_call.1} parent=1 // pred_region
      _
    $region17: #{tpu_custom_call.1} parent=1 // pred_fallthru
      _
    // Predicated region
    $region18: #{tpu_custom_call.1} parent=1 // pred_check
      _
    $region19: #{tpu_custom_call.1} parent=1 // pred_check_branch
      %39 = sbr.rel (0) target = $region21
    $region20: #{tpu_custom_call.1} parent=1 // pred_region
      %41 = dma.done [#allocation4], 32
    $region21: #{tpu_custom_call.1} parent=1 // pred_fallthru
      _
    // Predicated region
    $region22: #{tpu_custom_call.1} parent=1 // pred_check
      _
    $region23: #{tpu_custom_call.1} parent=1 // pred_check_branch
      %43 = sbr.rel (0) target = $region25
    $region24: #{tpu_custom_call.1} parent=1 // pred_region
      %45 = dma.done [#allocation6], 64
    $region25: #{tpu_custom_call.1} parent=1 // pred_fallthru
      _
    %v46 = vld [vmem:[#allocation3] sm:$0x3]
    %v47 = vld [vmem:[#allocation5] sm:$0xf]
    %v48 = vld [vmem:[%s2] sm:$0x1]
    %v49 = vld [vmem:[%s2 + $0x1] sm:$0x3]
    %v51 = vperm.slane %v48, 0
    %v53 = vmul.f32 %v46, %v51
    %vm54 = vcmask 254976
    %v55 = vsel %vm54, %v53, 0.0
    %56 = vadd.xlane.f32.xlu0 %v55
    %v57 = vpop.xlane.xlu0 %56
    %v59 = vperm.slane %v49, 0
    %v60 = vperm.slane %v49, 1
    %v61 = vrot.slane %v60, 6
    %vm62 = vcmask 1041408
    %v63 = vsel %vm62, %v59, %v61
    %v65 = vmul.f32 %v47, %v63
    %67 = vst [vmem:[#allocation1] ss:$4 sm:$0xff] %v65
    %v68 = vld.sshfl [vmem:[#allocation1] sm:$0xff pattern:$0x73625140]
    %v69 = vld.sshfl [vmem:[#allocation1 + $0x8] sm:$0xff pattern:$0x73625140]
    %v72 = vsel %vm62, %v68, 0.0
    %v73 = vsel %vm62, %v69, 0.0
    %v74 = vadd.f32 %v72, %v73
    %75 = vadd.xlane.f32.xlu0 %v74
    %v76 = vpop.xlane.xlu0 %75
    %v77 = vadd.f32 %v57, %v76
    %s78 = sld [smem:[#allocation2]]
    %v79 = vstv %s78
    %v80 = vadd.f32 %v77, %v79
    %vm81 = vcmask 1024
    %82 = vst.msk [vmem:[%s4] sm:$0x3] %vm81, %v80
    // Predicated region
    $region26: #{tpu_custom_call.1} parent=1 // pred_check
      _
    $region27: #{tpu_custom_call.1} parent=1 // pred_check_branch
      %84 = sbr.rel (0) target = $region29
    $region28: #{tpu_custom_call.1} parent=1 // pred_region
      _
    $region29: #{tpu_custom_call.1} parent=1 // pred_fallthru
      _
    // Predicated region
    $region30: #{tpu_custom_call.1} parent=1 // pred_check
      _
    $region31: #{tpu_custom_call.1} parent=1 // pred_check_branch
      %86 = sbr.rel (0) target = $region33
    $region32: #{tpu_custom_call.1} parent=1 // pred_region
      _
    $region33: #{tpu_custom_call.1} parent=1 // pred_fallthru
      _
    %87 = vsyncpa [#allocation4], 1
    %88 = vsyncpa [#allocation6], 1

</llo_original>
